<compile_context>
chip_gen: v7x
topology: tpu7x:2x2x1
jax: 0.10.0
libtpu: 0.0.40
codegen_flags: <defaults>
</compile_context>

<pallas_src>
import jax
import jax.numpy as jnp
import numpy as np
from jax import lax
from jax.experimental import pallas as pl
from jax.experimental.pallas import tpu as pltpu


def _round_up(x, m):
    return (x + m - 1) // m * m


# ----------------------------------------------------------------------------
# Fused kernel: im2col-conv3x3 + bias + ReLU + global avg pool + Linear embed
# (one batch element per grid step)
# ----------------------------------------------------------------------------
def encoder_fused_kernel(p_ref, w2_ref, cb_ref, ew_ref, eb_ref, o_ref):
    # p_ref:  (1, H*W, Kp)   bf16  im2col patches of one image (Kp = 9*Cin pad)
    # w2_ref: (Kp, Cp)       bf16  conv weights reshaped (9*Cin, Cout), padded
    # cb_ref: (1, Cp)        f32   conv bias (zero-padded channels)
    # ew_ref: (Cp, Ep)       bf16  embed weight, padded
    # eb_ref: (1, Ep)        f32   embed bias, padded
    # o_ref:  (1, 1, Ep)     f32   embedded features of one image (lane dense)
    hw = p_ref.shape[1]

    # Single MXU matmul replaces 9 shifted K=3 matmuls (f32 accumulation).
    conv = jnp.dot(p_ref[0], w2_ref[...],
                   preferred_element_type=jnp.float32)        # (H*W, Cp)
    conv = jnp.maximum(conv + cb_ref[...], 0.0)                # bias + ReLU

    # Global average pool fused in-kernel: feature map never leaves VMEM.
    pooled = jnp.sum(conv, axis=0, keepdims=True) * (1.0 / hw)  # (1, Cp) f32

    # Linear embed (bf16 MXU inputs, f32 accumulate).
    emb = jnp.dot(pooled.astype(jnp.bfloat16), ew_ref[...],
                  preferred_element_type=jnp.float32) + eb_ref[...]  # (1, Ep)
    o_ref[0] = emb


# ----------------------------------------------------------------------------
# Wrapper
# ----------------------------------------------------------------------------
@jax.jit
def encoder_cnn_forward(images_nchw, params):
    """images_nchw: (B, Cin, H, W) float32 -> (B, embed_size) float32."""
    x = jnp.transpose(images_nchw, (0, 2, 3, 1))  # NCHW -> NHWC
    B, H, W, Cin = x.shape

    conv_w = params["conv_w"]          # (3, 3, Cin, Cfeat)  HWIO
    conv_b = params["conv_b"]          # (1, Cfeat)
    embed_w = params["embed_w"]        # (Cfeat, E)
    embed_b = params["embed_b"]        # (1, E)
    Cfeat = conv_w.shape[-1]
    E = embed_w.shape[-1]

    LANE = 128
    Cp = _round_up(Cfeat, LANE)        # lane-dense conv output channels
    Ep = _round_up(E, LANE)            # lane-dense embed output
    K9 = 9 * Cin                       # im2col contraction size
    Kp = _round_up(K9, 8)              # pad K (27 -> 32)

    # --- wrapper-side im2col (layout plumbing): (B, H*W, 9*Cin) patches so the
    #     kernel runs a single aligned matmul with no in-kernel slicing. -----
    xp = jnp.pad(x, ((0, 0), (1, 1), (1, 1), (0, 0)))      # pad=1 for 3x3 conv
    taps = [xp[:, kh:kh + H, kw:kw + W, :]
            for kh in range(3) for kw in range(3)]
    patches = jnp.concatenate(taps, axis=-1).reshape(B, H * W, K9)
    patches = jnp.pad(patches, ((0, 0), (0, 0), (0, Kp - K9)))
    patches = patches.astype(jnp.bfloat16)

    # --- pad parameters to lane-dense shapes (zeros are exact no-ops through
    #     conv / ReLU(0)=0 / pool / zero embed rows & columns). --------------
    w2 = conv_w.reshape(K9, Cfeat)
    w2 = jnp.pad(w2, ((0, Kp - K9), (0, Cp - Cfeat))).astype(jnp.bfloat16)
    cb = jnp.pad(conv_b, ((0, 0), (0, Cp - Cfeat))).astype(jnp.float32)
    ew = jnp.pad(embed_w, ((0, Cp - Cfeat), (0, Ep - E))).astype(jnp.bfloat16)
    eb = jnp.pad(embed_b, ((0, 0), (0, Ep - E))).astype(jnp.float32)

    out_p = pl.pallas_call(
        encoder_fused_kernel,
        out_shape=jax.ShapeDtypeStruct((B, 1, Ep), jnp.float32),
        grid=(B,),
        in_specs=[
            pl.BlockSpec((1, H * W, Kp), lambda b: (b, 0, 0)),   # patches
            pl.BlockSpec((Kp, Cp), lambda b: (0, 0)),            # conv weights
            pl.BlockSpec((1, Cp), lambda b: (0, 0)),             # conv bias
            pl.BlockSpec((Cp, Ep), lambda b: (0, 0)),            # embed weight
            pl.BlockSpec((1, Ep), lambda b: (0, 0)),             # embed bias
        ],
        out_specs=pl.BlockSpec((1, 1, Ep), lambda b: (b, 0, 0)),
        compiler_params=pltpu.CompilerParams(
            dimension_semantics=("parallel",)),
    )(patches, w2, cb, ew, eb)

    return out_p.reshape(B, Ep)[:, :E]


# ----------------------------------------------------------------------------
# Pure-JAX reference (f32) for correctness check
# ----------------------------------------------------------------------------
def encoder_cnn_reference(images_nchw, params):
    x = jnp.transpose(images_nchw, (0, 2, 3, 1))
    y = lax.conv_general_dilated(
        x, params["conv_w"], window_strides=(1, 1), padding=[(1, 1), (1, 1)],
        dimension_numbers=("NHWC", "HWIO", "NHWC"))
    y = jnp.maximum(y + params["conv_b"][0][None, None, None, :], 0.0)
    pooled = jnp.mean(y, axis=(1, 2))                      # (B, Cfeat)
    return pooled @ params["embed_w"] + params["embed_b"][0][None, :]


if __name__ == "__main__":
    # Small shapes consistent with the forward: NCHW images in, (B, E) out.
    B, Cin, H, W = 2, 3, 16, 16
    Cfeat = 32      # stand-in for gglnet.fc.in_features (=1024) at small scale
    E = 16          # embed_size

    key = jax.random.PRNGKey(0)
    k_img, k_cw, k_cb, k_ew, k_eb = jax.random.split(key, 5)

    images = jax.random.normal(k_img, (B, Cin, H, W), jnp.float32)
    params = {
        "conv_w": 0.1 * jax.random.normal(k_cw, (3, 3, Cin, Cfeat), jnp.float32),
        "conv_b": 0.1 * jax.random.normal(k_cb, (1, Cfeat), jnp.float32),
        "embed_w": 0.1 * jax.random.normal(k_ew, (Cfeat, E), jnp.float32),
        "embed_b": 0.1 * jax.random.normal(k_eb, (1, E), jnp.float32),
    }

    out = jax.block_until_ready(encoder_cnn_forward(images, params))
    ref = jax.block_until_ready(encoder_cnn_reference(images, params))

    assert out.shape == (B, E), out.shape
    # bf16 MXU inputs with f32 accumulation -> loosened tolerance.
    np.testing.assert_allclose(np.asarray(out), np.asarray(ref),
                               rtol=2e-2, atol=2e-2)
    print("KERNEL_OK")
</pallas_src>

<mosaic_0001>
module attributes {stable_mosaic.version = 11 : i64} {
  func.func @encoder_fused_kernel(%arg0: i32, %arg1: memref<1x256x32xbf16, #tpu.memory_space<vmem>>, %arg2: memref<32x128xbf16, #tpu.memory_space<vmem>>, %arg3: memref<1x128xf32, #tpu.memory_space<vmem>>, %arg4: memref<128x128xbf16, #tpu.memory_space<vmem>>, %arg5: memref<1x128xf32, #tpu.memory_space<vmem>>, %arg6: memref<1x1x128xf32, #tpu.memory_space<vmem>>) attributes {dimension_semantics = [#tpu.dimension_semantics<parallel>], iteration_bounds = array<i64: 2>, scalar_prefetch = 0 : i64, scratch_operands = 0 : i64, tpu.core_type = #tpu.core_type<tc>, window_params = [{transform_indices = @transform_0, window_bounds = array<i64: 1, 256, 32>}, {pipeline_mode = #tpu.pipeline_mode<synchronous>, transform_indices = @transform_1, window_bounds = array<i64: 32, 128>}, {pipeline_mode = #tpu.pipeline_mode<synchronous>, transform_indices = @transform_2, window_bounds = array<i64: 1, 128>}, {pipeline_mode = #tpu.pipeline_mode<synchronous>, transform_indices = @transform_3, window_bounds = array<i64: 128, 128>}, {pipeline_mode = #tpu.pipeline_mode<synchronous>, transform_indices = @transform_4, window_bounds = array<i64: 1, 128>}, {transform_indices = @transform_5, window_bounds = array<i64: 1, 1, 128>}]} {
    %c0 = arith.constant 0 : index
    %c0_0 = arith.constant 0 : index
    %c0_1 = arith.constant 0 : index
    %0 = vector.load %arg1[%c0, %c0_0, %c0_1] : memref<1x256x32xbf16, #tpu.memory_space<vmem>>, vector<1x256x32xbf16>
    %1 = vector.shape_cast %0 : vector<1x256x32xbf16> to vector<256x32xbf16>
    %c0_2 = arith.constant 0 : index
    %c0_3 = arith.constant 0 : index
    %2 = vector.load %arg2[%c0_2, %c0_3] : memref<32x128xbf16, #tpu.memory_space<vmem>>, vector<32x128xbf16>
    %cst = arith.constant dense<0.000000e+00> : vector<256x128xf32>
    %3 = tpu.matmul %1, %2, %cst {dimension_numbers = #tpu.dot_dimension_numbers<[1], [0], [0], [1], [0, 0, 1, 1], [], []>} : vector<256x32xbf16>, vector<32x128xbf16>, vector<256x128xf32> -> vector<256x128xf32>
    %c0_4 = arith.constant 0 : index
    %c0_5 = arith.constant 0 : index
    %4 = vector.load %arg3[%c0_4, %c0_5] : memref<1x128xf32, #tpu.memory_space<vmem>>, vector<1x128xf32>
    %5 = vector.broadcast %4 : vector<1x128xf32> to vector<256x128xf32>
    %6 = arith.addf %3, %5 : vector<256x128xf32>
    %cst_6 = arith.constant 0.000000e+00 : f32
    %7 = vector.broadcast %cst_6 : f32 to vector<256x128xf32>
    %8 = arith.maximumf %6, %7 : vector<256x128xf32>
    %cst_7 = arith.constant dense<0.000000e+00> : vector<128xf32>
    %9 = vector.multi_reduction <add>, %8, %cst_7 [0] : vector<256x128xf32> to vector<128xf32>
    %10 = vector.shape_cast %9 : vector<128xf32> to vector<1x128xf32>
    %cst_8 = arith.constant 3.906250e-03 : f32
    %11 = vector.broadcast %cst_8 : f32 to vector<1x128xf32>
    %12 = arith.mulf %10, %11 : vector<1x128xf32>
    %13 = arith.truncf %12 : vector<1x128xf32> to vector<1x128xbf16>
    %c0_9 = arith.constant 0 : index
    %c0_10 = arith.constant 0 : index
    %14 = vector.load %arg4[%c0_9, %c0_10] : memref<128x128xbf16, #tpu.memory_space<vmem>>, vector<128x128xbf16>
    %cst_11 = arith.constant dense<0.000000e+00> : vector<1x128xf32>
    %15 = tpu.matmul %13, %14, %cst_11 {dimension_numbers = #tpu.dot_dimension_numbers<[1], [0], [0], [1], [0, 0, 1, 1], [], []>} : vector<1x128xbf16>, vector<128x128xbf16>, vector<1x128xf32> -> vector<1x128xf32>
    %c0_12 = arith.constant 0 : index
    %c0_13 = arith.constant 0 : index
    %16 = vector.load %arg5[%c0_12, %c0_13] : memref<1x128xf32, #tpu.memory_space<vmem>>, vector<1x128xf32>
    %17 = arith.addf %15, %16 : vector<1x128xf32>
    %c0_14 = arith.constant 0 : index
    %c0_15 = arith.constant 0 : index
    %c0_16 = arith.constant 0 : index
    %18 = vector.load %arg6[%c0_14, %c0_15, %c0_16] : memref<1x1x128xf32, #tpu.memory_space<vmem>>, vector<1x1x128xf32>
    %19 = vector.shape_cast %18 : vector<1x1x128xf32> to vector<1x128xf32>
    %20 = vector.shape_cast %17 : vector<1x128xf32> to vector<1x1x128xf32>
    tpu.vector_store %arg6[%c0_14, %c0_15, %c0_16], %20 {strides = array<i32>} : memref<1x1x128xf32, #tpu.memory_space<vmem>>, vector<1x1x128xf32>,
    return
  }
  func.func @transform_0(%arg0: i32) -> (i32, i32, i32) {
    %c0_i32 = arith.constant 0 : i32
    %c0_i32_0 = arith.constant 0 : i32
    %c0_i32_1 = arith.constant 0 : i32
    return %arg0, %c0_i32, %c0_i32_0 : i32, i32, i32
  }
  func.func @transform_1(%arg0: i32) -> (i32, i32) {
    %c0_i32 = arith.constant 0 : i32
    %c0_i32_0 = arith.constant 0 : i32
    %c0_i32_1 = arith.constant 0 : i32
    return %c0_i32, %c0_i32_0 : i32, i32
  }
  func.func @transform_2(%arg0: i32) -> (i32, i32) {
    %c0_i32 = arith.constant 0 : i32
    %c0_i32_0 = arith.constant 0 : i32
    %c0_i32_1 = arith.constant 0 : i32
    return %c0_i32, %c0_i32_0 : i32, i32
  }
  func.func @transform_3(%arg0: i32) -> (i32, i32) {
    %c0_i32 = arith.constant 0 : i32
    %c0_i32_0 = arith.constant 0 : i32
    %c0_i32_1 = arith.constant 0 : i32
    return %c0_i32, %c0_i32_0 : i32, i32
  }
  func.func @transform_4(%arg0: i32) -> (i32, i32) {
    %c0_i32 = arith.constant 0 : i32
    %c0_i32_0 = arith.constant 0 : i32
    %c0_i32_1 = arith.constant 0 : i32
    return %c0_i32, %c0_i32_0 : i32, i32
  }
  func.func @transform_5(%arg0: i32) -> (i32, i32, i32) {
    %c0_i32 = arith.constant 0 : i32
    %c0_i32_0 = arith.constant 0 : i32
    %c0_i32_1 = arith.constant 0 : i32
    return %arg0, %c0_i32, %c0_i32_0 : i32, i32, i32
  }
}

</mosaic_0001>

<llo_original>
// kernel: encoder_cnn_forward.1
$region0: #{encoder_cnn_forward.1}
  #allocation0 [shape = 'u32[]', space=smem, size = 0x4, offset = 0x4, fixed_abs, tag = 'smem constant byte address 0x4 - core index']
  #allocation1 [shape = 'u32[144,128]{1,0:T(1,128)}', space=vmem, size = 0x12000, scoped, tag = 'internal scratch']
  %s0 = inlined_call_operand.vmem [shape: bf16[2,256,32], index: 0, kind: input, shape index: {}]
  %s1 = inlined_call_operand.vmem [shape: bf16[32,128], index: 1, kind: input, shape index: {}]
  %s2 = inlined_call_operand.vmem [shape: f32[1,128], index: 2, kind: input, shape index: {}]
  %s3 = inlined_call_operand.vmem [shape: bf16[128,128], index: 3, kind: input, shape index: {}]
  %s4 = inlined_call_operand.vmem [shape: f32[1,128], index: 4, kind: input, shape index: {}]
  %s5 = inlined_call_operand.hbm [shape: f32[2,1,128], index: 5, kind: output, shape index: {}]
  %s6 = sld [smem:[#allocation0]]
  $region53: #{encoder_cnn_forward.1} parent=0
    _
  %s8 = ssub.s32 1, %s6
  %s9 = scalar_select 0, %s8, %s6
  $region1: #{encoder_cnn_forward.1} parent=0
    #allocation2 [shape = 'u8[1024]{0}', space=vmem, size = 0x400, scoped, tag = 'output window, operand 0']
    #allocation3 [shape = 's32[2]{0}', space=sflag, size = 0x8, scoped, tag = 'scoped memory for encoder_cnn_forward.1']
    %10 = vsyncpa [#allocation3], 0
    %s11 = scalar_lea.sflag [#allocation3], 1
    %12 = vsyncpa %s11, 0
    loop: start=0, step=1, limit=4
    $region2: #{encoder_cnn_forward.1} parent=1 // loop_pre_header
      _
    $region3: #{encoder_cnn_forward.1} parent=1 // loop_header
      %s14 = sphi 0, %s18
      %p15 = scmp.ge.s32.totalorder %s14, 4
      %s24 = sphi 0, %s26
      %s27 = sphi 0, %s24
      %s28 = sphi 0, %s27
      %s44 = sphi 0, %s28
      %s48 = sphi 0, %s48
      %s50 = sphi 0, %s48
      %s51 = sphi 0, %s50
      %s65 = sphi 0, %s51
      %s69 = sphi 0, %s69
      %s71 = sphi 0, %s69
      %s72 = sphi 0, %s71
      %s86 = sphi 0, %s72
      %s90 = sphi 0, %s90
      %s92 = sphi 0, %s90
      %s93 = sphi 0, %s92
      %s107 = sphi 0, %s93
      %s111 = sphi 0, %s111
      %s113 = sphi 0, %s111
      %s114 = sphi 0, %s113
      %s128 = sphi 0, %s114
      %s134 = sphi 0, %s136
      %s137 = sphi 0, %s134
      %s138 = sphi 0, %s137
      %s154 = sphi 0, %s138
    $region4: #{encoder_cnn_forward.1} parent=1 // loop_header_branch
      %17 = sbr.rel (%p15) target = $region8
    $region5: #{encoder_cnn_forward.1} parent=1 // loop_body
      %s19 = ssub.s32 %s14, 1
      %s20 = ssub.s32 %s14, 2
      %s21 = sadd.s32 %s14, 1
      %s22 = ssub.s32 %s14, %s21
      %p23 = scmp.eq.s32.totalorder %s22, 0
      %s25 = sadd.s32 %s24, 1
      %s26 = scalar_select %p23, %s24, %s25
      %p29 = pneg %p23
      %p30 = scmp.eq.s32.totalorder %s14, 1
      %p31 = por %p29, %p30
      %p32 = scmp.ne.s32.totalorder %s24, %s27
      %p33 = scmp.eq.s32.totalorder %s14, 0
      %p34 = por %p32, %p33
      %p35 = scmp.ne.s32.totalorder %s24, %s27
      %p36 = scmp.eq.s32.totalorder %s19, 1
      %p37 = por %p35, %p36
      %p38 = scmp.ne.s32.totalorder %s27, %s28
      %p39 = scmp.eq.s32.totalorder %s19, 0
      %p40 = por %p38, %p39
      %p41 = scmp.ne.s32.totalorder %s27, %s28
      %p42 = scmp.eq.s32.totalorder %s20, 1
      %p43 = por %p41, %p42
      %p45 = scmp.ne.s32.totalorder %s28, %s44
      %p46 = scmp.eq.s32.totalorder %s20, 0
      %p47 = por %p45, %p46
      %s49 = sadd.s32 %s48, 1
      %p52 = scmp.eq.s32.totalorder %s14, 1
      %p53 = scmp.ne.s32.totalorder %s48, %s50
      %p54 = scmp.eq.s32.totalorder %s14, 0
      %p55 = por %p53, %p54
      %p56 = scmp.ne.s32.totalorder %s48, %s50
      %p57 = scmp.eq.s32.totalorder %s19, 1
      %p58 = por %p56, %p57
      %p59 = scmp.ne.s32.totalorder %s50, %s51
      %p60 = scmp.eq.s32.totalorder %s19, 0
      %p61 = por %p59, %p60
      %p62 = scmp.ne.s32.totalorder %s50, %s51
      %p63 = scmp.eq.s32.totalorder %s20, 1
      %p64 = por %p62, %p63
      %p66 = scmp.ne.s32.totalorder %s51, %s65
      %p67 = scmp.eq.s32.totalorder %s20, 0
      %p68 = por %p66, %p67
      %s70 = sadd.s32 %s69, 1
      %p73 = scmp.eq.s32.totalorder %s14, 1
      %p74 = scmp.ne.s32.totalorder %s69, %s71
      %p75 = scmp.eq.s32.totalorder %s14, 0
      %p76 = por %p74, %p75
      %p77 = scmp.ne.s32.totalorder %s69, %s71
      %p78 = scmp.eq.s32.totalorder %s19, 1
      %p79 = por %p77, %p78
      %p80 = scmp.ne.s32.totalorder %s71, %s72
      %p81 = scmp.eq.s32.totalorder %s19, 0
      %p82 = por %p80, %p81
      %p83 = scmp.ne.s32.totalorder %s71, %s72
      %p84 = scmp.eq.s32.totalorder %s20, 1
      %p85 = por %p83, %p84
      %p87 = scmp.ne.s32.totalorder %s72, %s86
      %p88 = scmp.eq.s32.totalorder %s20, 0
      %p89 = por %p87, %p88
      %s91 = sadd.s32 %s90, 1
      %p94 = scmp.eq.s32.totalorder %s14, 1
      %p95 = scmp.ne.s32.totalorder %s90, %s92
      %p96 = scmp.eq.s32.totalorder %s14, 0
      %p97 = por %p95, %p96
      %p98 = scmp.ne.s32.totalorder %s90, %s92
      %p99 = scmp.eq.s32.totalorder %s19, 1
      %p100 = por %p98, %p99
      %p101 = scmp.ne.s32.totalorder %s92, %s93
      %p102 = scmp.eq.s32.totalorder %s19, 0
      %p103 = por %p101, %p102
      %p104 = scmp.ne.s32.totalorder %s92, %s93
      %p105 = scmp.eq.s32.totalorder %s20, 1
      %p106 = por %p104, %p105
      %p108 = scmp.ne.s32.totalorder %s93, %s107
      %p109 = scmp.eq.s32.totalorder %s20, 0
      %p110 = por %p108, %p109
      %s112 = sadd.s32 %s111, 1
      %p115 = scmp.eq.s32.totalorder %s14, 1
      %p116 = scmp.ne.s32.totalorder %s111, %s113
      %p117 = scmp.eq.s32.totalorder %s14, 0
      %p118 = por %p116, %p117
      %p119 = scmp.ne.s32.totalorder %s111, %s113
      %p120 = scmp.eq.s32.totalorder %s19, 1
      %p121 = por %p119, %p120
      %p122 = scmp.ne.s32.totalorder %s113, %s114
      %p123 = scmp.eq.s32.totalorder %s19, 0
      %p124 = por %p122, %p123
      %p125 = scmp.ne.s32.totalorder %s113, %s114
      %p126 = scmp.eq.s32.totalorder %s20, 1
      %p127 = por %p125, %p126
      %p129 = scmp.ne.s32.totalorder %s114, %s128
      %p130 = scmp.eq.s32.totalorder %s20, 0
      %p131 = por %p129, %p130
      %s132 = ssub.s32 %s14, %s21
      %p133 = scmp.eq.s32.totalorder %s132, 0
      %s135 = sadd.s32 %s134, 1
      %s136 = scalar_select %p133, %s134, %s135
      %p139 = pneg %p133
      %p140 = scmp.eq.s32.totalorder %s14, 1
      %p141 = por %p139, %p140
      %p142 = scmp.ne.s32.totalorder %s134, %s137
      %p143 = scmp.eq.s32.totalorder %s14, 0
      %p144 = por %p142, %p143
      %p145 = scmp.ne.s32.totalorder %s134, %s137
      %p146 = scmp.eq.s32.totalorder %s19, 1
      %p147 = por %p145, %p146
      %p148 = scmp.ne.s32.totalorder %s137, %s138
      %p149 = scmp.eq.s32.totalorder %s19, 0
      %p150 = por %p148, %p149
      %p151 = scmp.ne.s32.totalorder %s137, %s138
      %p152 = scmp.eq.s32.totalorder %s20, 1
      %p153 = por %p151, %p152
      %p155 = scmp.ne.s32.totalorder %s138, %s154
      %p156 = scmp.eq.s32.totalorder %s20, 0
      %p157 = por %p155, %p156
      %p158 = scmp.le.s32.totalorder 1, %s14
      %p159 = scmp.lt.s32.totalorder %s14, 3
      %p160 = pnand %p158, %p159
      %p161 = pneg %p160
      // Predicated region
      $region9: #{encoder_cnn_forward.1} parent=5 // pred_check
        _
      $region10: #{encoder_cnn_forward.1} parent=5 // pred_check_branch
        %163 = sbr.rel (%p160) target = $region12
      $region11: #{encoder_cnn_forward.1} parent=5 // pred_region
        %s164 = ssub.s32 %s14, 1
        // Predicated region
        $region13: #{encoder_cnn_forward.1} parent=11 // pred_check
          %p165 = pneg %p61
        $region14: #{encoder_cnn_forward.1} parent=11 // pred_check_branch
          %167 = sbr.rel (%p165) target = $region16
        $region15: #{encoder_cnn_forward.1} parent=11 // pred_region
          _
        $region16: #{encoder_cnn_forward.1} parent=11 // pred_fallthru
          _
        // Predicated region
        $region17: #{encoder_cnn_forward.1} parent=11 // pred_check
          %p168 = pneg %p82
        $region18: #{encoder_cnn_forward.1} parent=11 // pred_check_branch
          %170 = sbr.rel (%p168) target = $region20
        $region19: #{encoder_cnn_forward.1} parent=11 // pred_region
          _
        $region20: #{encoder_cnn_forward.1} parent=11 // pred_fallthru
          _
        // Predicated region
        $region21: #{encoder_cnn_forward.1} parent=11 // pred_check
          %p171 = pneg %p103
        $region22: #{encoder_cnn_forward.1} parent=11 // pred_check_branch
          %173 = sbr.rel (%p171) target = $region24
        $region23: #{encoder_cnn_forward.1} parent=11 // pred_region
          _
        $region24: #{encoder_cnn_forward.1} parent=11 // pred_fallthru
          _
        // Predicated region
        $region25: #{encoder_cnn_forward.1} parent=11 // pred_check
          %p174 = pneg %p124
        $region26: #{encoder_cnn_forward.1} parent=11 // pred_check_branch
          %176 = sbr.rel (%p174) target = $region28
        $region27: #{encoder_cnn_forward.1} parent=11 // pred_region
          _
        $region28: #{encoder_cnn_forward.1} parent=11 // pred_fallthru
          _
      $region12: #{encoder_cnn_forward.1} parent=5 // pred_fallthru
        _
      %p177 = scmp.lt.s32.totalorder %s14, 2
      // Predicated region
      $region29: #{encoder_cnn_forward.1} parent=5 // pred_check
        %p178 = pneg %p177
      $region30: #{encoder_cnn_forward.1} parent=5 // pred_check_branch
        %180 = sbr.rel (%p178) target = $region32
      $region31: #{encoder_cnn_forward.1} parent=5 // pred_region
        // Predicated region
        $region33: #{encoder_cnn_forward.1} parent=31 // pred_check
          %p181 = pneg %p34
        $region34: #{encoder_cnn_forward.1} parent=31 // pred_check_branch
          %183 = sbr.rel (%p181) target = $region36
        $region35: #{encoder_cnn_forward.1} parent=31 // pred_region
          %p184 = scmp.lt.s32.totalorder %s14, 1
          %s185 = scalar_select %p184, %s14, 1
          %s186 = smul.addr %s185, 32
          %s187 = smul.addr %s186, 4
          %s188 = scalar_lea.vmem %s0, %s187
        $region36: #{encoder_cnn_forward.1} parent=31 // pred_fallthru
          _
      $region32: #{encoder_cnn_forward.1} parent=5 // pred_fallthru
        _
      %p189 = scmp.le.s32.totalorder 1, %s14
      %p190 = scmp.lt.s32.totalorder %s14, 3
      %p191 = pnand %p189, %p190
      %p192 = pneg %p191
      // Predicated region
      $region37: #{encoder_cnn_forward.1} parent=5 // pred_check
        _
      $region38: #{encoder_cnn_forward.1} parent=5 // pred_check_branch
        %194 = sbr.rel (%p191) target = $region40
      $region39: #{encoder_cnn_forward.1} parent=5 // pred_region
        %s195 = ssub.s32 %s14, 1
        %p196 = scmp.lt.s32.totalorder %s19, 1
        %s197 = scalar_select %p196, %s19, 1
        %s198 = smul.addr %s197, 32
        %s199 = smul.addr %s198, 4
        %s200 = scalar_lea.vmem %s0, %s199
        %p201 = pneg %p40
        %p202 = pneg %p37
        %p203 = pneg %p61
        %p204 = pneg %p58
        %p205 = pneg %p82
        %p206 = pneg %p79
        %p207 = pneg %p103
        %p208 = pneg %p100
        %p209 = pneg %p124
        %p210 = pneg %p121
        %p211 = pneg %p150
        %p212 = pneg %p147
        %s213 = sand.u32 %s137, 1
        %s214 = scalar_lea.sflag [#allocation3], %s213
        %s215 = sand.u32 %s137, 1
        %s216 = scalar_lea.vmem [#allocation2], %s215
        %p217 = scmp.lt.s32.totalorder %s19, 1
        %s218 = scalar_select %p217, %s19, 1
        %s219 = smul.addr %s218, 32
        %s220 = smul.addr %s219, 4
        %s221 = scalar_lea.vmem %s0, %s220
        %v223 = vld [vmem:[%s221] sm:$0xf]
        %v224 = vld [vmem:[%s221 + $0x4] sm:$0xf]
        %v225 = vld [vmem:[%s221 + $0x8] sm:$0xf]
        %v226 = vld [vmem:[%s221 + $0xc] sm:$0xf]
        %v227 = vld [vmem:[%s221 + $0x10] sm:$0xf]
        %v228 = vld [vmem:[%s221 + $0x14] sm:$0xf]
        %v229 = vld [vmem:[%s221 + $0x18] sm:$0xf]
        %v230 = vld [vmem:[%s221 + $0x1c] sm:$0xf]
        %v231 = vld [vmem:[%s221 + $0x20] sm:$0xf]
        %v232 = vld [vmem:[%s221 + $0x24] sm:$0xf]
        %v233 = vld [vmem:[%s221 + $0x28] sm:$0xf]
        %v234 = vld [vmem:[%s221 + $0x2c] sm:$0xf]
        %v235 = vld [vmem:[%s221 + $0x30] sm:$0xf]
        %v236 = vld [vmem:[%s221 + $0x34] sm:$0xf]
        %v237 = vld [vmem:[%s221 + $0x38] sm:$0xf]
        %v238 = vld [vmem:[%s221 + $0x3c] sm:$0xf]
        %v239 = vld [vmem:[%s221 + $0x40] sm:$0xf]
        %v240 = vld [vmem:[%s221 + $0x44] sm:$0xf]
        %v241 = vld [vmem:[%s221 + $0x48] sm:$0xf]
        %v242 = vld [vmem:[%s221 + $0x4c] sm:$0xf]
        %v243 = vld [vmem:[%s221 + $0x50] sm:$0xf]
        %v244 = vld [vmem:[%s221 + $0x54] sm:$0xf]
        %v245 = vld [vmem:[%s221 + $0x58] sm:$0xf]
        %v246 = vld [vmem:[%s221 + $0x5c] sm:$0xf]
        %v247 = vld [vmem:[%s221 + $0x60] sm:$0xf]
        %v248 = vld [vmem:[%s221 + $0x64] sm:$0xf]
        %v249 = vld [vmem:[%s221 + $0x68] sm:$0xf]
        %v250 = vld [vmem:[%s221 + $0x6c] sm:$0xf]
        %v251 = vld [vmem:[%s221 + $0x70] sm:$0xf]
        %v252 = vld [vmem:[%s221 + $0x74] sm:$0xf]
        %v253 = vld [vmem:[%s221 + $0x78] sm:$0xf]
        %v254 = vld [vmem:[%s221 + $0x7c] sm:$0xf]
        %v255 = vld [vmem:[%s1] sm:$0xf]
        %v256 = vld [vmem:[%s1 + $0x4] sm:$0xf]
        %v257 = vld [vmem:[%s1 + $0x8] sm:$0xf]
        %v258 = vld [vmem:[%s1 + $0xc] sm:$0xf]
        %v259 = vld [vmem:[%s2] sm:$0x1]
        %v261 = vlaneseq
        %v262 = vshrl.u32 %v261, 7
        %v263 = vsub.s32 0, %v262
        %v264 = vrot.slane %v259, %v263
        %v298 = vunpack.c.l.b16 %v223
        %v299 = vunpack.c.l.b16 %v224
        %v300 = vunpack.c.l.b16 %v225
        %v301 = vunpack.c.l.b16 %v226
        %v302 = vunpack.c.l.b16 %v227
        %v303 = vunpack.c.l.b16 %v228
        %v304 = vunpack.c.l.b16 %v229
        %v305 = vunpack.c.l.b16 %v230
        %v306 = vunpack.c.l.b16 %v231
        %v307 = vunpack.c.l.b16 %v232
        %v308 = vunpack.c.l.b16 %v233
        %v309 = vunpack.c.l.b16 %v234
        %v310 = vunpack.c.l.b16 %v235
        %v311 = vunpack.c.l.b16 %v236
        %v312 = vunpack.c.l.b16 %v237
        %v313 = vunpack.c.l.b16 %v238
        %v314 = vunpack.c.l.b16 %v239
        %v315 = vunpack.c.l.b16 %v240
        %v316 = vunpack.c.l.b16 %v241
        %v317 = vunpack.c.l.b16 %v242
        %v318 = vunpack.c.l.b16 %v243
        %v319 = vunpack.c.l.b16 %v244
        %v320 = vunpack.c.l.b16 %v245
        %v321 = vunpack.c.l.b16 %v246
        %v322 = vunpack.c.l.b16 %v247
        %v323 = vunpack.c.l.b16 %v248
        %v324 = vunpack.c.l.b16 %v249
        %v325 = vunpack.c.l.b16 %v250
        %v326 = vunpack.c.l.b16 %v251
        %v327 = vunpack.c.l.b16 %v252
        %v328 = vunpack.c.l.b16 %v253
        %v329 = vunpack.c.l.b16 %v254
        %v330 = vpack.c.b16 %v299, %v298
        %v331 = vpack.c.b16 %v301, %v300
        %v332 = vpack.c.b16 %v303, %v302
        %v333 = vpack.c.b16 %v305, %v304
        %v334 = vpack.c.b16 %v307, %v306
        %v335 = vpack.c.b16 %v309, %v308
        %v336 = vpack.c.b16 %v311, %v310
        %v337 = vpack.c.b16 %v313, %v312
        %v338 = vpack.c.b16 %v315, %v314
        %v339 = vpack.c.b16 %v317, %v316
        %v340 = vpack.c.b16 %v319, %v318
        %v341 = vpack.c.b16 %v321, %v320
        %v342 = vpack.c.b16 %v323, %v322
        %v343 = vpack.c.b16 %v325, %v324
        %v344 = vpack.c.b16 %v327, %v326
        %v345 = vpack.c.b16 %v329, %v328
        %v350 = vunpack.c.l.b16 %v255
        %v351 = vunpack.c.l.b16 %v256
        %v352 = vunpack.c.l.b16 %v257
        %v353 = vunpack.c.l.b16 %v258
        %v354 = vpack.c.b16 %v351, %v350
        %v355 = vpack.c.b16 %v353, %v352
        %vm358 = vcmask 261120
        %v360 = vsel %vm358, %v330, 0
        %v363 = vsel %vm358, %v331, 0
        %v366 = vsel %vm358, %v332, 0
        %v369 = vsel %vm358, %v333, 0
        %v372 = vsel %vm358, %v334, 0
        %v375 = vsel %vm358, %v335, 0
        %v378 = vsel %vm358, %v336, 0
        %v381 = vsel %vm358, %v337, 0
        %v384 = vsel %vm358, %v338, 0
        %v387 = vsel %vm358, %v339, 0
        %v390 = vsel %vm358, %v340, 0
        %v393 = vsel %vm358, %v341, 0
        %v396 = vsel %vm358, %v342, 0
        %v399 = vsel %vm358, %v343, 0
        %v402 = vsel %vm358, %v344, 0
        %v405 = vsel %vm358, %v345, 0
        %407 = vmatprep.subr.bf16.mxu0 0
        %408 = vmatpush1.bf16.msra.mxu0 %v354
        %409 = vmatprep.subr.bf16.mxu0 0
        %410 = vmatpush1.bf16.msra.mxu0 %v355
        %411 = vmatprep.subr.bf16.mxu0 0
        %412 = vmatpush1.bf16.msra.mxu0 0
        %413 = vmatprep.subr.bf16.mxu0 0
        %414 = vmatpush1.bf16.msra.mxu0 0
        %415 = vmatprep.subr.bf16.mxu0 0
        %416 = vmatpush1.bf16.msra.mxu0 0
        %417 = vmatprep.subr.bf16.mxu0 0
        %418 = vmatpush1.bf16.msra.mxu0 0
        %419 = vmatprep.subr.bf16.mxu0 0
        %420 = vmatpush1.bf16.msra.mxu0 0
        %421 = vmatprep.subr.bf16.mxu0 0
        %422 = vmatpush1.bf16.msra.mxu0 0
        %423 = vmatprep.subr.bf16.mxu0 0
        %424 = vmatpush1.bf16.msra.mxu0 0
        %425 = vmatprep.subr.bf16.mxu0 0
        %426 = vmatpush1.bf16.msra.mxu0 0
        %427 = vmatprep.subr.bf16.mxu0 0
        %428 = vmatpush1.bf16.msra.mxu0 0
        %429 = vmatprep.subr.bf16.mxu0 0
        %430 = vmatpush1.bf16.msra.mxu0 0
        %431 = vmatprep.subr.bf16.mxu0 0
        %432 = vmatpush1.bf16.msra.mxu0 0
        %433 = vmatprep.subr.bf16.mxu0 0
        %434 = vmatpush1.bf16.msra.mxu0 0
        %435 = vmatprep.subr.bf16.mxu0 0
        %436 = vmatpush1.bf16.msra.mxu0 0
        %437 = vmatprep.subr.bf16.mxu0 0
        %438 = vmatpush1.bf16.msra.mxu0 0
        %439 = vmatprep.mubr.bf16.mxu0 0
        %440 = vmatmul.mubr.bf16.gmra.mrb[0].mxu0 %v360
        %v441 = vpop.f32.mrb[0].mxu0
        %v442 = vadd.f32 %v264, %v441
        %v443 = vpop.f32.mrb[0].mxu0
        %v444 = vpop.f32.mrb[0].mxu0
        %v445 = vadd.f32 %v264, %v444
        %v446 = vpop.f32.mrb[0].mxu0
        %447 = vmatprep.mubr.bf16.mxu0 0
        %448 = vmatmul.mubr.bf16.gmra.mrb[0].mxu0 %v363
        %v449 = vpop.f32.mrb[0].mxu0
        %v450 = vadd.f32 %v264, %v449
        %v451 = vpop.f32.mrb[0].mxu0
        %v452 = vpop.f32.mrb[0].mxu0
        %v453 = vadd.f32 %v264, %v452
        %v454 = vpop.f32.mrb[0].mxu0
        %455 = vmatprep.mubr.bf16.mxu0 0
        %456 = vmatmul.mubr.bf16.gmra.mrb[0].mxu0 %v366
        %v457 = vpop.f32.mrb[0].mxu0
        %v458 = vadd.f32 %v264, %v457
        %v459 = vpop.f32.mrb[0].mxu0
        %v460 = vpop.f32.mrb[0].mxu0
        %v461 = vadd.f32 %v264, %v460
        %v462 = vpop.f32.mrb[0].mxu0
        %463 = vmatprep.mubr.bf16.mxu0 0
        %464 = vmatmul.mubr.bf16.gmra.mrb[0].mxu0 %v369
        %v465 = vpop.f32.mrb[0].mxu0
        %v466 = vadd.f32 %v264, %v465
        %v467 = vpop.f32.mrb[0].mxu0
        %v468 = vpop.f32.mrb[0].mxu0
        %v469 = vadd.f32 %v264, %v468
        %v470 = vpop.f32.mrb[0].mxu0
        %471 = vmatprep.mubr.bf16.mxu0 0
        %472 = vmatmul.mubr.bf16.gmra.mrb[0].mxu0 %v372
        %v473 = vpop.f32.mrb[0].mxu0
        %v474 = vadd.f32 %v264, %v473
        %v475 = vpop.f32.mrb[0].mxu0
        %v476 = vpop.f32.mrb[0].mxu0
        %v477 = vadd.f32 %v264, %v476
        %v478 = vpop.f32.mrb[0].mxu0
        %479 = vmatprep.mubr.bf16.mxu0 0
        %480 = vmatmul.mubr.bf16.gmra.mrb[0].mxu0 %v375
        %v481 = vpop.f32.mrb[0].mxu0
        %v482 = vadd.f32 %v264, %v481
        %v483 = vpop.f32.mrb[0].mxu0
        %v484 = vpop.f32.mrb[0].mxu0
        %v485 = vadd.f32 %v264, %v484
        %v486 = vpop.f32.mrb[0].mxu0
        %487 = vmatprep.mubr.bf16.mxu0 0
        %488 = vmatmul.mubr.bf16.gmra.mrb[0].mxu0 %v378
        %v489 = vpop.f32.mrb[0].mxu0
        %v490 = vadd.f32 %v264, %v489
        %v491 = vpop.f32.mrb[0].mxu0
        %v492 = vpop.f32.mrb[0].mxu0
        %v493 = vadd.f32 %v264, %v492
        %v494 = vpop.f32.mrb[0].mxu0
        %495 = vmatprep.mubr.bf16.mxu0 0
        %496 = vmatmul.mubr.bf16.gmra.mrb[0].mxu0 %v381
        %v497 = vpop.f32.mrb[0].mxu0
        %v498 = vadd.f32 %v264, %v497
        %v499 = vpop.f32.mrb[0].mxu0
        %v500 = vpop.f32.mrb[0].mxu0
        %v501 = vadd.f32 %v264, %v500
        %v502 = vpop.f32.mrb[0].mxu0
        %503 = vmatprep.mubr.bf16.mxu0 0
        %504 = vmatmul.mubr.bf16.gmra.mrb[0].mxu0 %v384
        %v505 = vpop.f32.mrb[0].mxu0
        %v506 = vadd.f32 %v264, %v505
        %v507 = vpop.f32.mrb[0].mxu0
        %v508 = vpop.f32.mrb[0].mxu0
        %v509 = vadd.f32 %v264, %v508
        %v510 = vpop.f32.mrb[0].mxu0
        %511 = vmatprep.mubr.bf16.mxu0 0
        %512 = vmatmul.mubr.bf16.gmra.mrb[0].mxu0 %v387
        %v513 = vpop.f32.mrb[0].mxu0
        %v514 = vadd.f32 %v264, %v513
        %v515 = vpop.f32.mrb[0].mxu0
        %v516 = vpop.f32.mrb[0].mxu0
        %v517 = vadd.f32 %v264, %v516
        %v518 = vpop.f32.mrb[0].mxu0
        %519 = vmatprep.mubr.bf16.mxu0 0
        %520 = vmatmul.mubr.bf16.gmra.mrb[0].mxu0 %v390
        %v521 = vpop.f32.mrb[0].mxu0
        %v522 = vadd.f32 %v264, %v521
        %v523 = vpop.f32.mrb[0].mxu0
        %v524 = vpop.f32.mrb[0].mxu0
        %v525 = vadd.f32 %v264, %v524
        %v526 = vpop.f32.mrb[0].mxu0
        %527 = vmatprep.mubr.bf16.mxu0 0
        %528 = vmatmul.mubr.bf16.gmra.mrb[0].mxu0 %v393
        %v529 = vpop.f32.mrb[0].mxu0
        %v530 = vadd.f32 %v264, %v529
        %v531 = vpop.f32.mrb[0].mxu0
        %v532 = vpop.f32.mrb[0].mxu0
        %v533 = vadd.f32 %v264, %v532
        %v534 = vpop.f32.mrb[0].mxu0
        %535 = vmatprep.mubr.bf16.mxu0 0
        %536 = vmatmul.mubr.bf16.gmra.mrb[0].mxu0 %v396
        %v537 = vpop.f32.mrb[0].mxu0
        %v538 = vadd.f32 %v264, %v537
        %v539 = vpop.f32.mrb[0].mxu0
        %v540 = vpop.f32.mrb[0].mxu0
        %v541 = vadd.f32 %v264, %v540
        %v542 = vpop.f32.mrb[0].mxu0
        %543 = vmatprep.mubr.bf16.mxu0 0
        %544 = vmatmul.mubr.bf16.gmra.mrb[0].mxu0 %v399
        %v545 = vpop.f32.mrb[0].mxu0
        %v546 = vadd.f32 %v264, %v545
        %v547 = vpop.f32.mrb[0].mxu0
        %v548 = vpop.f32.mrb[0].mxu0
        %v549 = vadd.f32 %v264, %v548
        %v550 = vpop.f32.mrb[0].mxu0
        %551 = vmatprep.mubr.bf16.mxu0 0
        %552 = vmatmul.mubr.bf16.gmra.mrb[0].mxu0 %v402
        %v553 = vpop.f32.mrb[0].mxu0
        %v554 = vadd.f32 %v264, %v553
        %v555 = vpop.f32.mrb[0].mxu0
        %v556 = vpop.f32.mrb[0].mxu0
        %v557 = vadd.f32 %v264, %v556
        %v558 = vpop.f32.mrb[0].mxu0
        %559 = vmatprep.mubr.bf16.mxu0 0
        %560 = vmatmul.mubr.bf16.gmra.mrb[0].mxu0 %v405
        %v561 = vpop.f32.mrb[0].mxu0
        %v562 = vadd.f32 %v264, %v561
        %v563 = vpop.f32.mrb[0].mxu0
        %v564 = vpop.f32.mrb[0].mxu0
        %v565 = vadd.f32 %v264, %v564
        %v566 = vpop.f32.mrb[0].mxu0
        %567 = vdwg.mxu0
        %v568 = vmax.f32 %v442, 0.0
        %v569 = vmax.f32 %v445, 0.0
        %v570 = vmax.f32 %v450, 0.0
        %v571 = vmax.f32 %v453, 0.0
        %v572 = vmax.f32 %v458, 0.0
        %v573 = vmax.f32 %v461, 0.0
        %v574 = vmax.f32 %v466, 0.0
        %v575 = vmax.f32 %v469, 0.0
        %v576 = vmax.f32 %v474, 0.0
        %v577 = vmax.f32 %v477, 0.0
        %v578 = vmax.f32 %v482, 0.0
        %v579 = vmax.f32 %v485, 0.0
        %v580 = vmax.f32 %v490, 0.0
        %v581 = vmax.f32 %v493, 0.0
        %v582 = vmax.f32 %v498, 0.0
        %v583 = vmax.f32 %v501, 0.0
        %v584 = vmax.f32 %v506, 0.0
        %v585 = vmax.f32 %v509, 0.0
        %v586 = vmax.f32 %v514, 0.0
        %v587 = vmax.f32 %v517, 0.0
        %v588 = vmax.f32 %v522, 0.0
        %v589 = vmax.f32 %v525, 0.0
        %v590 = vmax.f32 %v530, 0.0
        %v591 = vmax.f32 %v533, 0.0
        %v592 = vmax.f32 %v538, 0.0
        %v593 = vmax.f32 %v541, 0.0
        %v594 = vmax.f32 %v546, 0.0
        %v595 = vmax.f32 %v549, 0.0
        %v596 = vmax.f32 %v554, 0.0
        %v597 = vmax.f32 %v557, 0.0
        %v598 = vmax.f32 %v562, 0.0
        %v599 = vmax.f32 %v565, 0.0
        %v600 = vadd.f32 %v568, %v569
        %v601 = vadd.f32 %v600, %v570
        %v602 = vadd.f32 %v601, %v571
        %v603 = vadd.f32 %v602, %v572
        %v604 = vadd.f32 %v603, %v573
        %v605 = vadd.f32 %v604, %v574
        %v606 = vadd.f32 %v605, %v575
        %v607 = vadd.f32 %v606, %v576
        %v608 = vadd.f32 %v607, %v577
        %v609 = vadd.f32 %v608, %v578
        %v610 = vadd.f32 %v609, %v579
        %v611 = vadd.f32 %v610, %v580
        %v612 = vadd.f32 %v611, %v581
        %v613 = vadd.f32 %v612, %v582
        %v614 = vadd.f32 %v613, %v583
        %v615 = vadd.f32 %v614, %v584
        %v616 = vadd.f32 %v615, %v585
        %v617 = vadd.f32 %v616, %v586
        %v618 = vadd.f32 %v617, %v587
        %v619 = vadd.f32 %v618, %v588
        %v620 = vadd.f32 %v619, %v589
        %v621 = vadd.f32 %v620, %v590
        %v622 = vadd.f32 %v621, %v591
        %v623 = vadd.f32 %v622, %v592
        %v624 = vadd.f32 %v623, %v593
        %v625 = vadd.f32 %v624, %v594
        %v626 = vadd.f32 %v625, %v595
        %v627 = vadd.f32 %v626, %v596
        %v628 = vadd.f32 %v627, %v597
        %v629 = vadd.f32 %v628, %v598
        %v630 = vadd.f32 %v629, %v599
        %v631 = vrot.slane %v630, 4
        %v632 = vadd.f32 %v630, %v631
        %v633 = vrot.slane %v632, 2
        %v634 = vadd.f32 %v632, %v633
        %v635 = vrot.slane %v634, 1
        %v636 = vadd.f32 %v634, %v635
        %v637 = vmul.f32 %v636, 0.00390625
        %v638 = vpack.c.bf16 %v637, %v637
        %v639 = vld [vmem:[%s3] sm:$0xf]
        %v640 = vld [vmem:[%s3 + $0x4] sm:$0xf]
        %v641 = vld [vmem:[%s3 + $0x8] sm:$0xf]
        %v642 = vld [vmem:[%s3 + $0xc] sm:$0xf]
        %v643 = vld [vmem:[%s3 + $0x10] sm:$0xf]
        %v644 = vld [vmem:[%s3 + $0x14] sm:$0xf]
        %v645 = vld [vmem:[%s3 + $0x18] sm:$0xf]
        %v646 = vld [vmem:[%s3 + $0x1c] sm:$0xf]
        %v647 = vld [vmem:[%s3 + $0x20] sm:$0xf]
        %v648 = vld [vmem:[%s3 + $0x24] sm:$0xf]
        %v649 = vld [vmem:[%s3 + $0x28] sm:$0xf]
        %v650 = vld [vmem:[%s3 + $0x2c] sm:$0xf]
        %v651 = vld [vmem:[%s3 + $0x30] sm:$0xf]
        %v652 = vld [vmem:[%s3 + $0x34] sm:$0xf]
        %v653 = vld [vmem:[%s3 + $0x38] sm:$0xf]
        %v654 = vld [vmem:[%s3 + $0x3c] sm:$0xf]
        %v655 = vld [vmem:[%s4] sm:$0x1]
        %v672 = vunpack.c.l.b16 %v639
        %v673 = vunpack.c.l.b16 %v640
        %v674 = vunpack.c.l.b16 %v641
        %v675 = vunpack.c.l.b16 %v642
        %v676 = vunpack.c.l.b16 %v643
        %v677 = vunpack.c.l.b16 %v644
        %v678 = vunpack.c.l.b16 %v645
        %v679 = vunpack.c.l.b16 %v646
        %v680 = vunpack.c.l.b16 %v647
        %v681 = vunpack.c.l.b16 %v648
        %v682 = vunpack.c.l.b16 %v649
        %v683 = vunpack.c.l.b16 %v650
        %v684 = vunpack.c.l.b16 %v651
        %v685 = vunpack.c.l.b16 %v652
        %v686 = vunpack.c.l.b16 %v653
        %v687 = vunpack.c.l.b16 %v654
        %v688 = vpack.c.b16 %v673, %v672
        %v689 = vpack.c.b16 %v675, %v674
        %v690 = vpack.c.b16 %v677, %v676
        %v691 = vpack.c.b16 %v679, %v678
        %v692 = vpack.c.b16 %v681, %v680
        %v693 = vpack.c.b16 %v683, %v682
        %v694 = vpack.c.b16 %v685, %v684
        %v695 = vpack.c.b16 %v687, %v686
        %704 = vmatprep.subr.bf16.mxu0 0
        %705 = vmatpush1.bf16.msra.mxu0 %v688
        %706 = vmatprep.subr.bf16.mxu0 0
        %707 = vmatpush1.bf16.msra.mxu0 %v689
        %708 = vmatprep.subr.bf16.mxu0 0
        %709 = vmatpush1.bf16.msra.mxu0 %v690
        %710 = vmatprep.subr.bf16.mxu0 0
        %711 = vmatpush1.bf16.msra.mxu0 %v691
        %712 = vmatprep.subr.bf16.mxu0 0
        %713 = vmatpush1.bf16.msra.mxu0 %v692
        %714 = vmatprep.subr.bf16.mxu0 0
        %715 = vmatpush1.bf16.msra.mxu0 %v693
        %716 = vmatprep.subr.bf16.mxu0 0
        %717 = vmatpush1.bf16.msra.mxu0 %v694
        %718 = vmatprep.subr.bf16.mxu0 0
        %719 = vmatpush1.bf16.msra.mxu0 %v695
        %720 = vmatprep.subr.bf16.mxu0 0
        %721 = vmatpush1.bf16.msra.mxu0 0
        %722 = vmatprep.subr.bf16.mxu0 0
        %723 = vmatpush1.bf16.msra.mxu0 0
        %724 = vmatprep.subr.bf16.mxu0 0
        %725 = vmatpush1.bf16.msra.mxu0 0
        %726 = vmatprep.subr.bf16.mxu0 0
        %727 = vmatpush1.bf16.msra.mxu0 0
        %728 = vmatprep.subr.bf16.mxu0 0
        %729 = vmatpush1.bf16.msra.mxu0 0
        %730 = vmatprep.subr.bf16.mxu0 0
        %731 = vmatpush1.bf16.msra.mxu0 0
        %732 = vmatprep.subr.bf16.mxu0 0
        %733 = vmatpush1.bf16.msra.mxu0 0
        %734 = vmatprep.subr.bf16.mxu0 0
        %735 = vmatpush1.bf16.msra.mxu0 0
        %736 = vmatprep.mubr.bf16.mxu0 0
        %737 = vmatmul.mubr.bf16.gmra.mrb[0].mxu0 %v638
        %v738 = vpop.f32.mrb[0].mxu0
        %v739 = vadd.f32 %v655, %v738
        %v740 = vpop.f32.mrb[0].mxu0
        %v741 = vpop.f32.mrb[0].mxu0
        %v742 = vpop.f32.mrb[0].mxu0
        %743 = vdwg.mxu0
        %744 = vst [vmem:[%s216] sm:$0x1] %v739
        %s745 = sand.u32 %s137, 1
        %s746 = scalar_lea.sflag [#allocation3], %s745
        %s747 = sand.u32 %s137, 1
        %s748 = scalar_lea.vmem [#allocation2], %s747
        // Predicated region
        $region41: #{encoder_cnn_forward.1} parent=39 // pred_check
          %p749 = pneg %p147
        $region42: #{encoder_cnn_forward.1} parent=39 // pred_check_branch
          %751 = sbr.rel (%p749) target = $region44
        $region43: #{encoder_cnn_forward.1} parent=39 // pred_region
          %s753 = ssub.s32 16, 16
          %754 = vsyncadd %s746, %s753
          %s755 = smul.addr %s19, 16
          %s756 = scalar_lea.hbm %s5, %s755
          %s758 = sshll.u32 %s748, 4
          %s759 = int_to_ptr.vmem [resolvable:$true] %s758
          %761 = dma.vmem_to_hbm [thread:$0]  %s759, 16, %s756, %s746
        $region44: #{encoder_cnn_forward.1} parent=39 // pred_fallthru
          _
      $region40: #{encoder_cnn_forward.1} parent=5 // pred_fallthru
        _
      %p762 = scmp.le.s32.totalorder 2, %s14
      // Predicated region
      $region45: #{encoder_cnn_forward.1} parent=5 // pred_check
        %p763 = pneg %p762
      $region46: #{encoder_cnn_forward.1} parent=5 // pred_check_branch
        %765 = sbr.rel (%p763) target = $region48
      $region47: #{encoder_cnn_forward.1} parent=5 // pred_region
        %s766 = ssub.s32 %s14, 2
        // Predicated region
        $region49: #{encoder_cnn_forward.1} parent=47 // pred_check
          %p767 = pneg %p153
        $region50: #{encoder_cnn_forward.1} parent=47 // pred_check_branch
          %769 = sbr.rel (%p767) target = $region52
        $region51: #{encoder_cnn_forward.1} parent=47 // pred_region
          %s770 = sand.u32 %s138, 1
          %s771 = scalar_lea.sflag [#allocation3], %s770
          %s772 = sand.u32 %s138, 1
          %s773 = scalar_lea.vmem [#allocation2], %s772
          %774 = dma.done %s771, 16
        $region52: #{encoder_cnn_forward.1} parent=47 // pred_fallthru
          _
      $region48: #{encoder_cnn_forward.1} parent=5 // pred_fallthru
        _
    $region6: #{encoder_cnn_forward.1} parent=1 // loop_footer
      %s18 = sadd.s32 1, %s14
    $region7: #{encoder_cnn_forward.1} parent=1 // loop_footer_branch
      %13 = sbr.rel target = $region3
    $region8: #{encoder_cnn_forward.1} parent=1 // loop_exit
      _
    %775 = vsyncpa [#allocation3], 1
    %s776 = scalar_lea.sflag [#allocation3], 1
    %777 = vsyncpa %s776, 1

</llo_original>
